<compile_context>
chip_gen: v7x
topology: tpu7x:2x2x1
jax: 0.10.0
libtpu: 0.0.40
codegen_flags: <defaults>
</compile_context>

<pallas_src>
import jax
import jax.numpy as jnp
from jax import lax
from jax.experimental import pallas as pl
from jax.experimental.pallas import tpu as pltpu

_EPS = 1e-5
_SUBLANE = 8


def _round_up(x, m):
    return ((x + m - 1) // m) * m


# ----------------------------------------------------------------------------
# Wrapper-side constant: 3x3-conv tap validity masks (hoisted out of the kernel).
# ----------------------------------------------------------------------------
def _make_tap_masks(H, W, imgs, cmid_p):
    """(9, cmid_p, imgs*H*W) f32 validity masks for the 9 taps of a 3x3 conv.

    Derived from the *within-image* pixel coordinate (lane % HW) so that, with
    several images folded onto the lane axis, the masks also zero pltpu.roll
    wrap-around across image boundaries. Pre-broadcast to cmid_p rows so every
    in-kernel use is an aligned (cmid_p, LANES) elementwise multiply.
    """
    HW = H * W
    q = jnp.arange(imgs * HW, dtype=jnp.int32) % HW
    xcol = q % W
    yrow = q // W
    rows = []
    for kh in range(3):
        for kw in range(3):
            ok = jnp.ones((imgs * HW,), jnp.bool_)
            if kh == 0:
                ok = ok & (yrow >= 1)
            if kh == 2:
                ok = ok & (yrow <= H - 2)
            if kw == 0:
                ok = ok & (xcol >= 1)
            if kw == 2:
                ok = ok & (xcol <= W - 2)
            rows.append(ok.astype(jnp.float32))
    m = jnp.stack(rows, axis=0)                               # (9, imgs*HW)
    return jnp.broadcast_to(m[:, None, :], (9, cmid_p, imgs * HW))


# ----------------------------------------------------------------------------
# Fused ResidualBlockDecode: one pallas_call, one grid step per image group.
# ----------------------------------------------------------------------------
def residual_block_decode(x_nchw, params1, params2, num_steps=None):
    """params{1,2}: folded bf16 tuples (wa, wb, wc), see fold_block_params."""
    B, Cin, H, W = x_nchw.shape
    HW = H * W
    wa1, wb1, wc1 = params1
    wa2, wb2, wc2 = params2
    Cout = wc2.shape[0]
    cmid_p = wb1.shape[0]
    assert wb2.shape[0] == cmid_p
    assert wa2.shape[1] == wc1.shape[0] + _SUBLANE   # block2 consumes block1 output

    # Grid choice: v7x has 2 TensorCores -> keep >=2 "parallel" steps when the
    # batch allows it. On single-TC v5e/v6e pass num_steps=1 so the whole batch
    # is folded onto the lane axis in one step (one prologue/epilogue).
    if num_steps is None:
        num_steps = 2 if (B % 2 == 0 and B >= 2) else 1
    assert B % num_steps == 0
    G = B // num_steps                 # images per grid step, folded onto lanes
    LANES = G * HW

    # Wrapper-side layout plumbing: (B, C, H, W) -> (steps, C, G*HW), lane-dense.
    x_steps = (x_nchw.reshape(num_steps, G, Cin, HW)
               .transpose(0, 2, 1, 3).reshape(num_steps, Cin, LANES))
    masks = _make_tap_masks(H, W, G, cmid_p)

    def kernel(x_ref, m_ref, wa1_r, wb1_r, wc1_r, wa2_r, wb2_r, wc2_r, o_ref):
        f32, bf16 = jnp.float32, jnp.bfloat16
        # (8, LANES) "bias block": row 0 = 1.0, rows 1..7 = 0. Appended to each
        # matmul operand, it contracts against the 8 trailing bias columns of
        # the packed weights, so every bias add rides the MXU.
        bias_blk = (lax.broadcasted_iota(jnp.int32, (_SUBLANE, LANES), 0) == 0
                    ).astype(f32)

        def bottleneck(x, wa_r, wb_r, wc_r):
            cm = wb_r.shape[0]          # padded mid-channel count (sublane multiple)

            # conv1(1x1)+bn1 fused with downsample(1x1)+bn (biases included):
            # ONE matmul reads x once; result split at an 8-aligned row offset.
            xa = jnp.concatenate([x, bias_blk], axis=0).astype(bf16)
            h = jnp.dot(wa_r[...], xa, preferred_element_type=f32)
            h1 = jnp.maximum(h[:cm], 0.0)        # (cm,   LANES)  main branch
            idn = h[cm:]                         # (cout, LANES)  identity branch

            # conv2(3x3, pad=1)+bn2: roll the INPUT, not the output. 9 rolled &
            # border-masked copies of h1 (+ bias block) stacked along K give ONE
            # K = 9*cm + 8 matmul; the 9-tap accumulation happens inside the MXU.
            taps = []
            for kh in range(3):
                for kw in range(3):
                    t = kh * 3 + kw
                    d = (kh - 1) * W + (kw - 1)       # flat spatial shift of tap t
                    ht = h1 if d == 0 else pltpu.roll(h1, (-d) % LANES, axis=1)
                    if t != 4:                        # center tap needs no mask
                        ht = ht * m_ref[t]
                    taps.append(ht)
            taps.append(bias_blk)
            stacked = jnp.concatenate(taps, axis=0).astype(bf16)   # (9*cm+8, LANES)
            h2 = jnp.maximum(
                jnp.dot(wb_r[...], stacked, preferred_element_type=f32), 0.0)

            # conv3(1x1)+bn3 (+bias), residual add, relu.
            h2a = jnp.concatenate([h2, bias_blk], axis=0).astype(bf16)
            h3 = jnp.dot(wc_r[...], h2a, preferred_element_type=f32)
            return jnp.maximum(h3 + idn, 0.0)        # (cout, LANES)

        x = x_ref[0]
        y1 = bottleneck(x, wa1_r, wb1_r, wc1_r)
        y2 = bottleneck(y1, wa2_r, wb2_r, wc2_r)
        o_ref[0] = y2.astype(o_ref.dtype)

    def full_spec(a):
        # Whole (tiny) constant array resident in VMEM; block == full array dims,
        # constant index map -> not re-fetched across grid steps.
        return pl.BlockSpec(a.shape, lambda s, n=a.ndim: (0,) * n)

    # VMEM footprint is a few hundred KiB -- no vmem_limit override needed.
    # TODO(synk): when H/W/C scale, tile H with a 1-row halo and budget against
    # v7x's 64 MiB VMEM / 32 MiB default scoped limit (vmem_limit_bytes).
    out = pl.pallas_call(
        kernel,
        out_shape=jax.ShapeDtypeStruct((num_steps, Cout, LANES), x_nchw.dtype),
        grid=(num_steps,),
        in_specs=[pl.BlockSpec((1, Cin, LANES), lambda s: (s, 0, 0)),
                  full_spec(masks),
                  full_spec(wa1), full_spec(wb1), full_spec(wc1),
                  full_spec(wa2), full_spec(wb2), full_spec(wc2)],
        out_specs=pl.BlockSpec((1, Cout, LANES), lambda s: (s, 0, 0)),
        compiler_params=pltpu.CompilerParams(
            dimension_semantics=("parallel",)),   # steps independent -> 2 TCs on v7x
    )(x_steps, masks, wa1, wb1, wc1, wa2, wb2, wc2)
    return (out.reshape(num_steps, Cout, G, HW)
            .transpose(0, 2, 1, 3).reshape(B, Cout, H, W))


# ----------------------------------------------------------------------------
# Deterministic parameter construction (PyTorch __init__ shapes) + BN folding.
# ----------------------------------------------------------------------------
def _make_conv(key, cout, cin, kh, kw):
    kw_, kb = jax.random.split(key)
    fan_in = cin * kh * kw
    w = jax.random.normal(kw_, (cout, cin, kh, kw), jnp.float32) / jnp.sqrt(fan_in)
    b = jax.random.normal(kb, (cout,), jnp.float32) * 0.1
    return w, b


def _make_bn(key, c):
    k1, k2, k3, k4 = jax.random.split(key, 4)
    gamma = jax.random.uniform(k1, (c,), jnp.float32, minval=0.5, maxval=1.5)
    beta = jax.random.normal(k2, (c,), jnp.float32) * 0.1
    mean = jax.random.normal(k3, (c,), jnp.float32) * 0.1
    var = jax.random.uniform(k4, (c,), jnp.float32, minval=0.5, maxval=1.5)
    return gamma, beta, mean, var


def make_block_params(key, inplanes, planes):
    cmid = planes // 4
    ks = jax.random.split(key, 8)
    w1, b1 = _make_conv(ks[0], cmid, inplanes, 1, 1)
    w2, b2 = _make_conv(ks[1], cmid, cmid, 3, 3)
    w3, b3 = _make_conv(ks[2], planes, cmid, 1, 1)
    wd, bd = _make_conv(ks[3], planes, inplanes, 1, 1)
    return dict(w1=w1, b1=b1, bn1=_make_bn(ks[4], cmid),
                w2=w2, b2=b2, bn2=_make_bn(ks[5], cmid),
                w3=w3, b3=b3, bn3=_make_bn(ks[6], planes),
                wd=wd, bd=bd, bnd=_make_bn(ks[7], planes))


def _fold_bn_into_conv(w_oihw, b, bn):
    """Eval-mode BN folded directly into the conv weight + bias (scale on O axis)."""
    gamma, beta, mean, var = bn
    scale = gamma / jnp.sqrt(var + _EPS)
    return w_oihw * scale[:, None, None, None], (b - mean) * scale + beta


def _with_bias_cols(w2d, bias):
    """Append 8 columns: column 0 carries the bias, columns 1..7 are zero.
    They contract against the in-kernel bias block (row 0 = 1, rows 1..7 = 0)."""
    extra = jnp.zeros((w2d.shape[0], _SUBLANE), w2d.dtype).at[:, 0].set(bias)
    return jnp.concatenate([w2d, extra], axis=1)


def fold_block_params(p, dtype=jnp.bfloat16):
    """Packed kernel weights (wa, wb, wc) with BN + biases folded, stored bf16:

      wa: (cmid_p + cout, cin      + 8)  conv1 rows stacked on downsample rows
      wb: (cmid_p,        9*cmid_p + 8)  3x3 taps stacked along K (t = kh*3 + kw)
      wc: (cout,          cmid_p   + 8)  conv3
    Matmuls keep preferred_element_type=f32; bf16 operands match what default MXU
    precision runs anyway, while halving weight VMEM / vld traffic.
    """
    w1, b1 = _fold_bn_into_conv(p['w1'], p['b1'], p['bn1'])   # (Cmid, Cin, 1, 1)
    w2, b2 = _fold_bn_into_conv(p['w2'], p['b2'], p['bn2'])   # (Cmid, Cmid, 3, 3)
    w3, b3 = _fold_bn_into_conv(p['w3'], p['b3'], p['bn3'])   # (Cout, Cmid, 1, 1)
    wd, bd = _fold_bn_into_conv(p['wd'], p['bd'], p['bnd'])   # (Cout, Cin, 1, 1)
    cmid, cin = w1.shape[0], w1.shape[1]
    cmid_p = _round_up(cmid, _SUBLANE)     # pad to a sublane multiple -> only
    pad = cmid_p - cmid                    # 8-aligned slices in the kernel

    # conv1 rows (zero-padded to cmid_p) stacked on top of the downsample rows.
    wa = _with_bias_cols(
        jnp.concatenate([jnp.pad(w1[:, :, 0, 0], ((0, pad), (0, 0))),
                         wd[:, :, 0, 0]], axis=0),
        jnp.concatenate([jnp.pad(b1, (0, pad)), bd]))

    # conv2 as (cmid_p, 9*cmid_p): column t*cmid_p + i holds w2[o, i, kh, kw]
    # for t = kh*3 + kw (pad rows/cols are zero), matching the in-kernel stack.
    w2t = jnp.pad(jnp.transpose(w2, (0, 2, 3, 1)),            # (O, kh, kw, I)
                  ((0, pad), (0, 0), (0, 0), (0, pad))).reshape(cmid_p, 9 * cmid_p)
    wb = _with_bias_cols(w2t, jnp.pad(b2, (0, pad)))

    wc = _with_bias_cols(jnp.pad(w3[:, :, 0, 0], ((0, 0), (0, pad))), b3)
    return (wa.astype(dtype), wb.astype(dtype), wc.astype(dtype))


# ----------------------------------------------------------------------------
# Plain-JAX NCHW reference (eval-mode BN), used only for correctness checking.
# ----------------------------------------------------------------------------
def _conv_ref(x, w, b, padding):
    out = lax.conv_general_dilated(
        x, w, window_strides=(1, 1),
        padding=[(padding, padding), (padding, padding)],
        dimension_numbers=("NCHW", "OIHW", "NCHW"),
        precision=lax.Precision.HIGHEST)
    return out + b.reshape(1, -1, 1, 1)


def _bn_ref(x, bn):
    gamma, beta, mean, var = (a.reshape(1, -1, 1, 1) for a in bn)
    return (x - mean) * (gamma / jnp.sqrt(var + _EPS)) + beta


def residual_block_ref(x, p):
    out = jnp.maximum(_bn_ref(_conv_ref(x, p['w1'], p['b1'], 0), p['bn1']), 0.0)
    out = jnp.maximum(_bn_ref(_conv_ref(out, p['w2'], p['b2'], 1), p['bn2']), 0.0)
    out = _bn_ref(_conv_ref(out, p['w3'], p['b3'], 0), p['bn3'])
    # inplanes != planes*4 for these configs, so the downsample path is always
    # taken -- same as the kernel.
    idn = _bn_ref(_conv_ref(x, p['wd'], p['bd'], 0), p['bnd'])
    return jnp.maximum(out + idn, 0.0)


if __name__ == "__main__":
    B, H, W = 2, 16, 16
    in_channels, out_channels = 8, 16      # Cmid = out_channels // 4 = 4

    key = jax.random.PRNGKey(0)
    kx, k1, k2 = jax.random.split(key, 3)

    # PyTorch-style NCHW input (kept NCHW at the interface; kernel is lane-dense).
    x_nchw = jax.random.normal(kx, (B, in_channels, H, W), jnp.float32)

    raw1 = make_block_params(k1, in_channels, out_channels)
    raw2 = make_block_params(k2, out_channels, out_channels)
    p1 = fold_block_params(raw1)
    p2 = fold_block_params(raw2)

    ref = residual_block_ref(residual_block_ref(x_nchw, raw1), raw2)

    # v7x-friendly default: 2 "parallel" grid steps feed both TensorCores.
    y_steps2 = jax.block_until_ready(residual_block_decode(x_nchw, p1, p2,
                                                           num_steps=2))
    # v5e/v6e setting: single step with the whole batch folded onto the lane
    # axis (also exercises the cross-image roll-wrap masking).
    y_steps1 = jax.block_until_ready(residual_block_decode(x_nchw, p1, p2,
                                                           num_steps=1))

    # Kernel matmuls run with bf16 operands (what default MXU precision does
    # anyway) against an f32 HIGHEST reference -> widened tolerance.
    for y in (y_steps2, y_steps1):
        err = float(jnp.max(jnp.abs(y - ref)))
        assert jnp.allclose(y, ref, rtol=5e-2, atol=5e-2), f"max abs err {err}"

    print("KERNEL_OK")
</pallas_src>

<mosaic_0001>
module attributes {stable_mosaic.version = 11 : i64} {
  func.func @kernel(%arg0: i32, %arg1: memref<1x8x256xf32, #tpu.memory_space<vmem>>, %arg2: memref<9x8x256xf32, #tpu.memory_space<vmem>>, %arg3: memref<24x16xbf16, #tpu.memory_space<vmem>>, %arg4: memref<8x80xbf16, #tpu.memory_space<vmem>>, %arg5: memref<16x16xbf16, #tpu.memory_space<vmem>>, %arg6: memref<24x24xbf16, #tpu.memory_space<vmem>>, %arg7: memref<8x80xbf16, #tpu.memory_space<vmem>>, %arg8: memref<16x16xbf16, #tpu.memory_space<vmem>>, %arg9: memref<1x16x256xf32, #tpu.memory_space<vmem>>) attributes {dimension_semantics = [#tpu.dimension_semantics<parallel>], iteration_bounds = array<i64: 2>, scalar_prefetch = 0 : i64, scratch_operands = 0 : i64, tpu.core_type = #tpu.core_type<tc>, window_params = [{transform_indices = @transform_0, window_bounds = array<i64: 1, 8, 256>}, {pipeline_mode = #tpu.pipeline_mode<synchronous>, transform_indices = @transform_1, window_bounds = array<i64: 9, 8, 256>}, {pipeline_mode = #tpu.pipeline_mode<synchronous>, transform_indices = @transform_2, window_bounds = array<i64: 24, 16>}, {pipeline_mode = #tpu.pipeline_mode<synchronous>, transform_indices = @transform_3, window_bounds = array<i64: 8, 80>}, {pipeline_mode = #tpu.pipeline_mode<synchronous>, transform_indices = @transform_4, window_bounds = array<i64: 16, 16>}, {pipeline_mode = #tpu.pipeline_mode<synchronous>, transform_indices = @transform_5, window_bounds = array<i64: 24, 24>}, {pipeline_mode = #tpu.pipeline_mode<synchronous>, transform_indices = @transform_6, window_bounds = array<i64: 8, 80>}, {pipeline_mode = #tpu.pipeline_mode<synchronous>, transform_indices = @transform_7, window_bounds = array<i64: 16, 16>}, {transform_indices = @transform_8, window_bounds = array<i64: 1, 16, 256>}]} {
    %0 = tpu.iota {dimensions = array<i32: 0>} : vector<8x256xi32>
    %c0_i32 = arith.constant 0 : i32
    %1 = vector.broadcast %c0_i32 : i32 to vector<8x256xi32>
    %2 = arith.cmpi eq, %0, %1 : vector<8x256xi32>
    %3 = arith.extui %2 : vector<8x256xi1> to vector<8x256xi32>
    %4 = arith.sitofp %3 : vector<8x256xi32> to vector<8x256xf32>
    %c0 = arith.constant 0 : index
    %c0_0 = arith.constant 0 : index
    %c0_1 = arith.constant 0 : index
    %5 = vector.load %arg1[%c0, %c0_0, %c0_1] : memref<1x8x256xf32, #tpu.memory_space<vmem>>, vector<1x8x256xf32>
    %6 = vector.shape_cast %5 : vector<1x8x256xf32> to vector<8x256xf32>
    %7 = tpu.concatenate %6, %4 in 0 : vector<8x256xf32>, vector<8x256xf32> -> vector<16x256xf32>
    %8 = arith.truncf %7 : vector<16x256xf32> to vector<16x256xbf16>
    %c0_2 = arith.constant 0 : index
    %c0_3 = arith.constant 0 : index
    %9 = vector.load %arg3[%c0_2, %c0_3] : memref<24x16xbf16, #tpu.memory_space<vmem>>, vector<24x16xbf16>
    %cst = arith.constant dense<0.000000e+00> : vector<24x256xf32>
    %10 = tpu.matmul %9, %8, %cst {dimension_numbers = #tpu.dot_dimension_numbers<[1], [0], [0], [1], [0, 0, 1, 1], [], []>} : vector<24x16xbf16>, vector<16x256xbf16>, vector<24x256xf32> -> vector<24x256xf32>
    %11 = vector.extract_strided_slice %10 {offsets = [0, 0], sizes = [8, 256], strides = [1, 1]} : vector<24x256xf32> to vector<8x256xf32>
    %cst_4 = arith.constant 0.000000e+00 : f32
    %12 = vector.broadcast %cst_4 : f32 to vector<8x256xf32>
    %13 = arith.maximumf %11, %12 : vector<8x256xf32>
    %14 = vector.extract_strided_slice %10 {offsets = [8, 0], sizes = [16, 256], strides = [1, 1]} : vector<24x256xf32> to vector<16x256xf32>
    %c17_i32 = arith.constant 17 : i32
    %15 = tpu.dynamic_rotate %13 by %c17_i32 dim 1 : vector<8x256xf32>, i32 -> vector<8x256xf32>
    %c0_5 = arith.constant 0 : index
    %c0_6 = arith.constant 0 : index
    %c0_7 = arith.constant 0 : index
    %16 = vector.load %arg2[%c0_5, %c0_6, %c0_7] : memref<9x8x256xf32, #tpu.memory_space<vmem>>, vector<1x8x256xf32>
    %17 = vector.shape_cast %16 : vector<1x8x256xf32> to vector<8x256xf32>
    %18 = arith.mulf %15, %17 : vector<8x256xf32>
    %c16_i32 = arith.constant 16 : i32
    %19 = tpu.dynamic_rotate %13 by %c16_i32 dim 1 : vector<8x256xf32>, i32 -> vector<8x256xf32>
    %c1 = arith.constant 1 : index
    %c0_8 = arith.constant 0 : index
    %c0_9 = arith.constant 0 : index
    %20 = vector.load %arg2[%c1, %c0_8, %c0_9] : memref<9x8x256xf32, #tpu.memory_space<vmem>>, vector<1x8x256xf32>
    %21 = vector.shape_cast %20 : vector<1x8x256xf32> to vector<8x256xf32>
    %22 = arith.mulf %19, %21 : vector<8x256xf32>
    %c15_i32 = arith.constant 15 : i32
    %23 = tpu.dynamic_rotate %13 by %c15_i32 dim 1 : vector<8x256xf32>, i32 -> vector<8x256xf32>
    %c2 = arith.constant 2 : index
    %c0_10 = arith.constant 0 : index
    %c0_11 = arith.constant 0 : index
    %24 = vector.load %arg2[%c2, %c0_10, %c0_11] : memref<9x8x256xf32, #tpu.memory_space<vmem>>, vector<1x8x256xf32>
    %25 = vector.shape_cast %24 : vector<1x8x256xf32> to vector<8x256xf32>
    %26 = arith.mulf %23, %25 : vector<8x256xf32>
    %c1_i32 = arith.constant 1 : i32
    %27 = tpu.dynamic_rotate %13 by %c1_i32 dim 1 : vector<8x256xf32>, i32 -> vector<8x256xf32>
    %c3 = arith.constant 3 : index
    %c0_12 = arith.constant 0 : index
    %c0_13 = arith.constant 0 : index
    %28 = vector.load %arg2[%c3, %c0_12, %c0_13] : memref<9x8x256xf32, #tpu.memory_space<vmem>>, vector<1x8x256xf32>
    %29 = vector.shape_cast %28 : vector<1x8x256xf32> to vector<8x256xf32>
    %30 = arith.mulf %27, %29 : vector<8x256xf32>
    %c255_i32 = arith.constant 255 : i32
    %31 = tpu.dynamic_rotate %13 by %c255_i32 dim 1 : vector<8x256xf32>, i32 -> vector<8x256xf32>
    %c5 = arith.constant 5 : index
    %c0_14 = arith.constant 0 : index
    %c0_15 = arith.constant 0 : index
    %32 = vector.load %arg2[%c5, %c0_14, %c0_15] : memref<9x8x256xf32, #tpu.memory_space<vmem>>, vector<1x8x256xf32>
    %33 = vector.shape_cast %32 : vector<1x8x256xf32> to vector<8x256xf32>
    %34 = arith.mulf %31, %33 : vector<8x256xf32>
    %c241_i32 = arith.constant 241 : i32
    %35 = tpu.dynamic_rotate %13 by %c241_i32 dim 1 : vector<8x256xf32>, i32 -> vector<8x256xf32>
    %c6 = arith.constant 6 : index
    %c0_16 = arith.constant 0 : index
    %c0_17 = arith.constant 0 : index
    %36 = vector.load %arg2[%c6, %c0_16, %c0_17] : memref<9x8x256xf32, #tpu.memory_space<vmem>>, vector<1x8x256xf32>
    %37 = vector.shape_cast %36 : vector<1x8x256xf32> to vector<8x256xf32>
    %38 = arith.mulf %35, %37 : vector<8x256xf32>
    %c240_i32 = arith.constant 240 : i32
    %39 = tpu.dynamic_rotate %13 by %c240_i32 dim 1 : vector<8x256xf32>, i32 -> vector<8x256xf32>
    %c7 = arith.constant 7 : index
    %c0_18 = arith.constant 0 : index
    %c0_19 = arith.constant 0 : index
    %40 = vector.load %arg2[%c7, %c0_18, %c0_19] : memref<9x8x256xf32, #tpu.memory_space<vmem>>, vector<1x8x256xf32>
    %41 = vector.shape_cast %40 : vector<1x8x256xf32> to vector<8x256xf32>
    %42 = arith.mulf %39, %41 : vector<8x256xf32>
    %c239_i32 = arith.constant 239 : i32
    %43 = tpu.dynamic_rotate %13 by %c239_i32 dim 1 : vector<8x256xf32>, i32 -> vector<8x256xf32>
    %c8 = arith.constant 8 : index
    %c0_20 = arith.constant 0 : index
    %c0_21 = arith.constant 0 : index
    %44 = vector.load %arg2[%c8, %c0_20, %c0_21] : memref<9x8x256xf32, #tpu.memory_space<vmem>>, vector<1x8x256xf32>
    %45 = vector.shape_cast %44 : vector<1x8x256xf32> to vector<8x256xf32>
    %46 = arith.mulf %43, %45 : vector<8x256xf32>
    %47 = tpu.concatenate %18, %22, %26, %30, %13, %34, %38, %42, %46, %4 in 0 : vector<8x256xf32>, vector<8x256xf32>, vector<8x256xf32>, vector<8x256xf32>, vector<8x256xf32>, vector<8x256xf32>, vector<8x256xf32>, vector<8x256xf32>, vector<8x256xf32>, vector<8x256xf32> -> vector<80x256xf32>
    %48 = arith.truncf %47 : vector<80x256xf32> to vector<80x256xbf16>
    %c0_22 = arith.constant 0 : index
    %c0_23 = arith.constant 0 : index
    %49 = vector.load %arg4[%c0_22, %c0_23] : memref<8x80xbf16, #tpu.memory_space<vmem>>, vector<8x80xbf16>
    %cst_24 = arith.constant dense<0.000000e+00> : vector<8x256xf32>
    %50 = tpu.matmul %49, %48, %cst_24 {dimension_numbers = #tpu.dot_dimension_numbers<[1], [0], [0], [1], [0, 0, 1, 1], [], []>} : vector<8x80xbf16>, vector<80x256xbf16>, vector<8x256xf32> -> vector<8x256xf32>
    %cst_25 = arith.constant 0.000000e+00 : f32
    %51 = vector.broadcast %cst_25 : f32 to vector<8x256xf32>
    %52 = arith.maximumf %50, %51 : vector<8x256xf32>
    %53 = tpu.concatenate %52, %4 in 0 : vector<8x256xf32>, vector<8x256xf32> -> vector<16x256xf32>
    %54 = arith.truncf %53 : vector<16x256xf32> to vector<16x256xbf16>
    %c0_26 = arith.constant 0 : index
    %c0_27 = arith.constant 0 : index
    %55 = vector.load %arg5[%c0_26, %c0_27] : memref<16x16xbf16, #tpu.memory_space<vmem>>, vector<16x16xbf16>
    %cst_28 = arith.constant dense<0.000000e+00> : vector<16x256xf32>
    %56 = tpu.matmul %55, %54, %cst_28 {dimension_numbers = #tpu.dot_dimension_numbers<[1], [0], [0], [1], [0, 0, 1, 1], [], []>} : vector<16x16xbf16>, vector<16x256xbf16>, vector<16x256xf32> -> vector<16x256xf32>
    %57 = arith.addf %56, %14 : vector<16x256xf32>
    %cst_29 = arith.constant 0.000000e+00 : f32
    %58 = vector.broadcast %cst_29 : f32 to vector<16x256xf32>
    %59 = arith.maximumf %57, %58 : vector<16x256xf32>
    %60 = tpu.concatenate %59, %4 in 0 : vector<16x256xf32>, vector<8x256xf32> -> vector<24x256xf32>
    %61 = arith.truncf %60 : vector<24x256xf32> to vector<24x256xbf16>
    %c0_30 = arith.constant 0 : index
    %c0_31 = arith.constant 0 : index
    %62 = vector.load %arg6[%c0_30, %c0_31] : memref<24x24xbf16, #tpu.memory_space<vmem>>, vector<24x24xbf16>
    %cst_32 = arith.constant dense<0.000000e+00> : vector<24x256xf32>
    %63 = tpu.matmul %62, %61, %cst_32 {dimension_numbers = #tpu.dot_dimension_numbers<[1], [0], [0], [1], [0, 0, 1, 1], [], []>} : vector<24x24xbf16>, vector<24x256xbf16>, vector<24x256xf32> -> vector<24x256xf32>
    %64 = vector.extract_strided_slice %63 {offsets = [0, 0], sizes = [8, 256], strides = [1, 1]} : vector<24x256xf32> to vector<8x256xf32>
    %cst_33 = arith.constant 0.000000e+00 : f32
    %65 = vector.broadcast %cst_33 : f32 to vector<8x256xf32>
    %66 = arith.maximumf %64, %65 : vector<8x256xf32>
    %67 = vector.extract_strided_slice %63 {offsets = [8, 0], sizes = [16, 256], strides = [1, 1]} : vector<24x256xf32> to vector<16x256xf32>
    %c17_i32_34 = arith.constant 17 : i32
    %68 = tpu.dynamic_rotate %66 by %c17_i32_34 dim 1 : vector<8x256xf32>, i32 -> vector<8x256xf32>
    %c0_35 = arith.constant 0 : index
    %c0_36 = arith.constant 0 : index
    %c0_37 = arith.constant 0 : index
    %69 = vector.load %arg2[%c0_35, %c0_36, %c0_37] : memref<9x8x256xf32, #tpu.memory_space<vmem>>, vector<1x8x256xf32>
    %70 = vector.shape_cast %69 : vector<1x8x256xf32> to vector<8x256xf32>
    %71 = arith.mulf %68, %70 : vector<8x256xf32>
    %c16_i32_38 = arith.constant 16 : i32
    %72 = tpu.dynamic_rotate %66 by %c16_i32_38 dim 1 : vector<8x256xf32>, i32 -> vector<8x256xf32>
    %c1_39 = arith.constant 1 : index
    %c0_40 = arith.constant 0 : index
    %c0_41 = arith.constant 0 : index
    %73 = vector.load %arg2[%c1_39, %c0_40, %c0_41] : memref<9x8x256xf32, #tpu.memory_space<vmem>>, vector<1x8x256xf32>
    %74 = vector.shape_cast %73 : vector<1x8x256xf32> to vector<8x256xf32>
    %75 = arith.mulf %72, %74 : vector<8x256xf32>
    %c15_i32_42 = arith.constant 15 : i32
    %76 = tpu.dynamic_rotate %66 by %c15_i32_42 dim 1 : vector<8x256xf32>, i32 -> vector<8x256xf32>
    %c2_43 = arith.constant 2 : index
    %c0_44 = arith.constant 0 : index
    %c0_45 = arith.constant 0 : index
    %77 = vector.load %arg2[%c2_43, %c0_44, %c0_45] : memref<9x8x256xf32, #tpu.memory_space<vmem>>, vector<1x8x256xf32>
    %78 = vector.shape_cast %77 : vector<1x8x256xf32> to vector<8x256xf32>
    %79 = arith.mulf %76, %78 : vector<8x256xf32>
    %c1_i32_46 = arith.constant 1 : i32
    %80 = tpu.dynamic_rotate %66 by %c1_i32_46 dim 1 : vector<8x256xf32>, i32 -> vector<8x256xf32>
    %c3_47 = arith.constant 3 : index
    %c0_48 = arith.constant 0 : index
    %c0_49 = arith.constant 0 : index
    %81 = vector.load %arg2[%c3_47, %c0_48, %c0_49] : memref<9x8x256xf32, #tpu.memory_space<vmem>>, vector<1x8x256xf32>
    %82 = vector.shape_cast %81 : vector<1x8x256xf32> to vector<8x256xf32>
    %83 = arith.mulf %80, %82 : vector<8x256xf32>
    %c255_i32_50 = arith.constant 255 : i32
    %84 = tpu.dynamic_rotate %66 by %c255_i32_50 dim 1 : vector<8x256xf32>, i32 -> vector<8x256xf32>
    %c5_51 = arith.constant 5 : index
    %c0_52 = arith.constant 0 : index
    %c0_53 = arith.constant 0 : index
    %85 = vector.load %arg2[%c5_51, %c0_52, %c0_53] : memref<9x8x256xf32, #tpu.memory_space<vmem>>, vector<1x8x256xf32>
    %86 = vector.shape_cast %85 : vector<1x8x256xf32> to vector<8x256xf32>
    %87 = arith.mulf %84, %86 : vector<8x256xf32>
    %c241_i32_54 = arith.constant 241 : i32
    %88 = tpu.dynamic_rotate %66 by %c241_i32_54 dim 1 : vector<8x256xf32>, i32 -> vector<8x256xf32>
    %c6_55 = arith.constant 6 : index
    %c0_56 = arith.constant 0 : index
    %c0_57 = arith.constant 0 : index
    %89 = vector.load %arg2[%c6_55, %c0_56, %c0_57] : memref<9x8x256xf32, #tpu.memory_space<vmem>>, vector<1x8x256xf32>
    %90 = vector.shape_cast %89 : vector<1x8x256xf32> to vector<8x256xf32>
    %91 = arith.mulf %88, %90 : vector<8x256xf32>
    %c240_i32_58 = arith.constant 240 : i32
    %92 = tpu.dynamic_rotate %66 by %c240_i32_58 dim 1 : vector<8x256xf32>, i32 -> vector<8x256xf32>
    %c7_59 = arith.constant 7 : index
    %c0_60 = arith.constant 0 : index
    %c0_61 = arith.constant 0 : index
    %93 = vector.load %arg2[%c7_59, %c0_60, %c0_61] : memref<9x8x256xf32, #tpu.memory_space<vmem>>, vector<1x8x256xf32>
    %94 = vector.shape_cast %93 : vector<1x8x256xf32> to vector<8x256xf32>
    %95 = arith.mulf %92, %94 : vector<8x256xf32>
    %c239_i32_62 = arith.constant 239 : i32
    %96 = tpu.dynamic_rotate %66 by %c239_i32_62 dim 1 : vector<8x256xf32>, i32 -> vector<8x256xf32>
    %c8_63 = arith.constant 8 : index
    %c0_64 = arith.constant 0 : index
    %c0_65 = arith.constant 0 : index
    %97 = vector.load %arg2[%c8_63, %c0_64, %c0_65] : memref<9x8x256xf32, #tpu.memory_space<vmem>>, vector<1x8x256xf32>
    %98 = vector.shape_cast %97 : vector<1x8x256xf32> to vector<8x256xf32>
    %99 = arith.mulf %96, %98 : vector<8x256xf32>
    %100 = tpu.concatenate %71, %75, %79, %83, %66, %87, %91, %95, %99, %4 in 0 : vector<8x256xf32>, vector<8x256xf32>, vector<8x256xf32>, vector<8x256xf32>, vector<8x256xf32>, vector<8x256xf32>, vector<8x256xf32>, vector<8x256xf32>, vector<8x256xf32>, vector<8x256xf32> -> vector<80x256xf32>
    %101 = arith.truncf %100 : vector<80x256xf32> to vector<80x256xbf16>
    %c0_66 = arith.constant 0 : index
    %c0_67 = arith.constant 0 : index
    %102 = vector.load %arg7[%c0_66, %c0_67] : memref<8x80xbf16, #tpu.memory_space<vmem>>, vector<8x80xbf16>
    %cst_68 = arith.constant dense<0.000000e+00> : vector<8x256xf32>
    %103 = tpu.matmul %102, %101, %cst_68 {dimension_numbers = #tpu.dot_dimension_numbers<[1], [0], [0], [1], [0, 0, 1, 1], [], []>} : vector<8x80xbf16>, vector<80x256xbf16>, vector<8x256xf32> -> vector<8x256xf32>
    %cst_69 = arith.constant 0.000000e+00 : f32
    %104 = vector.broadcast %cst_69 : f32 to vector<8x256xf32>
    %105 = arith.maximumf %103, %104 : vector<8x256xf32>
    %106 = tpu.concatenate %105, %4 in 0 : vector<8x256xf32>, vector<8x256xf32> -> vector<16x256xf32>
    %107 = arith.truncf %106 : vector<16x256xf32> to vector<16x256xbf16>
    %c0_70 = arith.constant 0 : index
    %c0_71 = arith.constant 0 : index
    %108 = vector.load %arg8[%c0_70, %c0_71] : memref<16x16xbf16, #tpu.memory_space<vmem>>, vector<16x16xbf16>
    %cst_72 = arith.constant dense<0.000000e+00> : vector<16x256xf32>
    %109 = tpu.matmul %108, %107, %cst_72 {dimension_numbers = #tpu.dot_dimension_numbers<[1], [0], [0], [1], [0, 0, 1, 1], [], []>} : vector<16x16xbf16>, vector<16x256xbf16>, vector<16x256xf32> -> vector<16x256xf32>
    %110 = arith.addf %109, %67 : vector<16x256xf32>
    %cst_73 = arith.constant 0.000000e+00 : f32
    %111 = vector.broadcast %cst_73 : f32 to vector<16x256xf32>
    %112 = arith.maximumf %110, %111 : vector<16x256xf32>
    %c0_74 = arith.constant 0 : index
    %c0_75 = arith.constant 0 : index
    %c0_76 = arith.constant 0 : index
    %113 = vector.load %arg9[%c0_74, %c0_75, %c0_76] : memref<1x16x256xf32, #tpu.memory_space<vmem>>, vector<1x16x256xf32>
    %114 = vector.shape_cast %113 : vector<1x16x256xf32> to vector<16x256xf32>
    %115 = vector.shape_cast %112 : vector<16x256xf32> to vector<1x16x256xf32>
    tpu.vector_store %arg9[%c0_74, %c0_75, %c0_76], %115 {strides = array<i32>} : memref<1x16x256xf32, #tpu.memory_space<vmem>>, vector<1x16x256xf32>,
    return
  }
  func.func @transform_0(%arg0: i32) -> (i32, i32, i32) {
    %c0_i32 = arith.constant 0 : i32
    %c0_i32_0 = arith.constant 0 : i32
    %c0_i32_1 = arith.constant 0 : i32
    return %arg0, %c0_i32, %c0_i32_0 : i32, i32, i32
  }
  func.func @transform_1(%arg0: i32) -> (i32, i32, i32) {
    %c0_i32 = arith.constant 0 : i32
    %c0_i32_0 = arith.constant 0 : i32
    %c0_i32_1 = arith.constant 0 : i32
    %c0_i32_2 = arith.constant 0 : i32
    return %c0_i32, %c0_i32_0, %c0_i32_1 : i32, i32, i32
  }
  func.func @transform_2(%arg0: i32) -> (i32, i32) {
    %c0_i32 = arith.constant 0 : i32
    %c0_i32_0 = arith.constant 0 : i32
    %c0_i32_1 = arith.constant 0 : i32
    return %c0_i32, %c0_i32_0 : i32, i32
  }
  func.func @transform_3(%arg0: i32) -> (i32, i32) {
    %c0_i32 = arith.constant 0 : i32
    %c0_i32_0 = arith.constant 0 : i32
    %c0_i32_1 = arith.constant 0 : i32
    return %c0_i32, %c0_i32_0 : i32, i32
  }
  func.func @transform_4(%arg0: i32) -> (i32, i32) {
    %c0_i32 = arith.constant 0 : i32
    %c0_i32_0 = arith.constant 0 : i32
    %c0_i32_1 = arith.constant 0 : i32
    return %c0_i32, %c0_i32_0 : i32, i32
  }
  func.func @transform_5(%arg0: i32) -> (i32, i32) {
    %c0_i32 = arith.constant 0 : i32
    %c0_i32_0 = arith.constant 0 : i32
    %c0_i32_1 = arith.constant 0 : i32
    return %c0_i32, %c0_i32_0 : i32, i32
  }
  func.func @transform_6(%arg0: i32) -> (i32, i32) {
    %c0_i32 = arith.constant 0 : i32
    %c0_i32_0 = arith.constant 0 : i32
    %c0_i32_1 = arith.constant 0 : i32
    return %c0_i32, %c0_i32_0 : i32, i32
  }
  func.func @transform_7(%arg0: i32) -> (i32, i32) {
    %c0_i32 = arith.constant 0 : i32
    %c0_i32_0 = arith.constant 0 : i32
    %c0_i32_1 = arith.constant 0 : i32
    return %c0_i32, %c0_i32_0 : i32, i32
  }
  func.func @transform_8(%arg0: i32) -> (i32, i32, i32) {
    %c0_i32 = arith.constant 0 : i32
    %c0_i32_0 = arith.constant 0 : i32
    %c0_i32_1 = arith.constant 0 : i32
    return %arg0, %c0_i32, %c0_i32_0 : i32, i32, i32
  }
}

</mosaic_0001>

<llo_original>
// kernel: tpu_custom_call.1
$region0: #{tpu_custom_call.1}
  #allocation0 [shape = 'u32[]', space=smem, size = 0x4, offset = 0x4, fixed_abs, tag = 'smem constant byte address 0x4 - core index']
  #allocation1 [shape = 'u32[144,128]{1,0:T(1,128)}', space=vmem, size = 0x12000, scoped, tag = 'internal scratch']
  %s0 = inlined_call_operand.hbm [shape: f32[2,8,256], index: 0, kind: input, shape index: {}]
  %s1 = inlined_call_operand.hbm [shape: f32[9,8,256], index: 1, kind: input, shape index: {}]
  %s2 = inlined_call_operand.vmem [shape: bf16[24,16], index: 2, kind: input, shape index: {}]
  %s3 = inlined_call_operand.hbm [shape: bf16[8,80], index: 3, kind: input, shape index: {}]
  %s4 = inlined_call_operand.vmem [shape: bf16[16,16], index: 4, kind: input, shape index: {}]
  %s5 = inlined_call_operand.vmem [shape: bf16[24,24], index: 5, kind: input, shape index: {}]
  %s6 = inlined_call_operand.vmem [shape: bf16[8,80], index: 6, kind: input, shape index: {}]
  %s7 = inlined_call_operand.vmem [shape: bf16[16,16], index: 7, kind: input, shape index: {}]
  %s8 = inlined_call_operand.hbm [shape: f32[2,16,256], index: 8, kind: output, shape index: {}]
  %s9 = sld [smem:[#allocation0]]
  $region77: #{tpu_custom_call.1} parent=0
    _
  %s11 = ssub.s32 1, %s9
  %s12 = scalar_select 0, %s11, %s9
  $region1: #{tpu_custom_call.1} parent=0
    #allocation2 [shape = 'u8[16384]{0}', space=vmem, size = 0x4000, scoped, tag = 'input window, operand 0']
    #allocation3 [shape = 's32[2]{0}', space=sflag, size = 0x8, scoped, tag = 'scoped memory for tpu_custom_call.1']
    #allocation4 [shape = 's32[2]{0}', space=sflag, size = 0x8, scoped, tag = 'scoped memory for tpu_custom_call.1']
    #allocation5 [shape = 'u8[73728]{0}', space=vmem, size = 0x12000, scoped, tag = 'input window, operand 1, single buffered']
    #allocation6 [shape = 's32[1]{0}', space=sflag, size = 0x4, scoped, tag = 'scoped memory for tpu_custom_call.1']
    #allocation7 [shape = 'u8[2048]{0}', space=vmem, size = 0x800, scoped, tag = 'input window, operand 3, single buffered']
    #allocation8 [shape = 'u8[32768]{0}', space=vmem, size = 0x8000, scoped, tag = 'output window, operand 0']
    %13 = vsyncpa [#allocation3], 0
    %s14 = scalar_lea.sflag [#allocation3], 1
    %15 = vsyncpa %s14, 0
    %16 = vsyncpa [#allocation6], 0
    %17 = vsyncpa [#allocation4], 0
    %s18 = scalar_lea.sflag [#allocation4], 1
    %19 = vsyncpa %s18, 0
    loop: start=0, step=1, limit=4
    $region2: #{tpu_custom_call.1} parent=1 // loop_pre_header
      _
    $region3: #{tpu_custom_call.1} parent=1 // loop_header
      %s21 = sphi 0, %s25
      %p22 = scmp.ge.s32.totalorder %s21, 4
      %s31 = sphi 0, %s33
      %s34 = sphi 0, %s31
      %s35 = sphi 0, %s34
      %s51 = sphi 0, %s35
      %s55 = sphi 0, %s55
      %s57 = sphi 0, %s55
      %s58 = sphi 0, %s57
      %s72 = sphi 0, %s58
      %s76 = sphi 0, %s76
      %s78 = sphi 0, %s76
      %s79 = sphi 0, %s78
      %s93 = sphi 0, %s79
      %s97 = sphi 0, %s97
      %s99 = sphi 0, %s97
      %s100 = sphi 0, %s99
      %s114 = sphi 0, %s100
      %s118 = sphi 0, %s118
      %s120 = sphi 0, %s118
      %s121 = sphi 0, %s120
      %s135 = sphi 0, %s121
      %s139 = sphi 0, %s139
      %s141 = sphi 0, %s139
      %s142 = sphi 0, %s141
      %s156 = sphi 0, %s142
      %s160 = sphi 0, %s160
      %s162 = sphi 0, %s160
      %s163 = sphi 0, %s162
      %s177 = sphi 0, %s163
      %s181 = sphi 0, %s181
      %s183 = sphi 0, %s181
      %s184 = sphi 0, %s183
      %s198 = sphi 0, %s184
      %s204 = sphi 0, %s206
      %s207 = sphi 0, %s204
      %s208 = sphi 0, %s207
      %s224 = sphi 0, %s208
    $region4: #{tpu_custom_call.1} parent=1 // loop_header_branch
      %24 = sbr.rel (%p22) target = $region8
    $region5: #{tpu_custom_call.1} parent=1 // loop_body
      %s26 = ssub.s32 %s21, 1
      %s27 = ssub.s32 %s21, 2
      %s28 = sadd.s32 %s21, 1
      %s29 = ssub.s32 %s21, %s28
      %p30 = scmp.eq.s32.totalorder %s29, 0
      %s32 = sadd.s32 %s31, 1
      %s33 = scalar_select %p30, %s31, %s32
      %p36 = pneg %p30
      %p37 = scmp.eq.s32.totalorder %s21, 1
      %p38 = por %p36, %p37
      %p39 = scmp.ne.s32.totalorder %s31, %s34
      %p40 = scmp.eq.s32.totalorder %s21, 0
      %p41 = por %p39, %p40
      %p42 = scmp.ne.s32.totalorder %s31, %s34
      %p43 = scmp.eq.s32.totalorder %s26, 1
      %p44 = por %p42, %p43
      %p45 = scmp.ne.s32.totalorder %s34, %s35
      %p46 = scmp.eq.s32.totalorder %s26, 0
      %p47 = por %p45, %p46
      %p48 = scmp.ne.s32.totalorder %s34, %s35
      %p49 = scmp.eq.s32.totalorder %s27, 1
      %p50 = por %p48, %p49
      %p52 = scmp.ne.s32.totalorder %s35, %s51
      %p53 = scmp.eq.s32.totalorder %s27, 0
      %p54 = por %p52, %p53
      %s56 = sadd.s32 %s55, 1
      %p59 = scmp.eq.s32.totalorder %s21, 1
      %p60 = scmp.ne.s32.totalorder %s55, %s57
      %p61 = scmp.eq.s32.totalorder %s21, 0
      %p62 = por %p60, %p61
      %p63 = scmp.ne.s32.totalorder %s55, %s57
      %p64 = scmp.eq.s32.totalorder %s26, 1
      %p65 = por %p63, %p64
      %p66 = scmp.ne.s32.totalorder %s57, %s58
      %p67 = scmp.eq.s32.totalorder %s26, 0
      %p68 = por %p66, %p67
      %p69 = scmp.ne.s32.totalorder %s57, %s58
      %p70 = scmp.eq.s32.totalorder %s27, 1
      %p71 = por %p69, %p70
      %p73 = scmp.ne.s32.totalorder %s58, %s72
      %p74 = scmp.eq.s32.totalorder %s27, 0
      %p75 = por %p73, %p74
      %s77 = sadd.s32 %s76, 1
      %p80 = scmp.eq.s32.totalorder %s21, 1
      %p81 = scmp.ne.s32.totalorder %s76, %s78
      %p82 = scmp.eq.s32.totalorder %s21, 0
      %p83 = por %p81, %p82
      %p84 = scmp.ne.s32.totalorder %s76, %s78
      %p85 = scmp.eq.s32.totalorder %s26, 1
      %p86 = por %p84, %p85
      %p87 = scmp.ne.s32.totalorder %s78, %s79
      %p88 = scmp.eq.s32.totalorder %s26, 0
      %p89 = por %p87, %p88
      %p90 = scmp.ne.s32.totalorder %s78, %s79
      %p91 = scmp.eq.s32.totalorder %s27, 1
      %p92 = por %p90, %p91
      %p94 = scmp.ne.s32.totalorder %s79, %s93
      %p95 = scmp.eq.s32.totalorder %s27, 0
      %p96 = por %p94, %p95
      %s98 = sadd.s32 %s97, 1
      %p101 = scmp.eq.s32.totalorder %s21, 1
      %p102 = scmp.ne.s32.totalorder %s97, %s99
      %p103 = scmp.eq.s32.totalorder %s21, 0
      %p104 = por %p102, %p103
      %p105 = scmp.ne.s32.totalorder %s97, %s99
      %p106 = scmp.eq.s32.totalorder %s26, 1
      %p107 = por %p105, %p106
      %p108 = scmp.ne.s32.totalorder %s99, %s100
      %p109 = scmp.eq.s32.totalorder %s26, 0
      %p110 = por %p108, %p109
      %p111 = scmp.ne.s32.totalorder %s99, %s100
      %p112 = scmp.eq.s32.totalorder %s27, 1
      %p113 = por %p111, %p112
      %p115 = scmp.ne.s32.totalorder %s100, %s114
      %p116 = scmp.eq.s32.totalorder %s27, 0
      %p117 = por %p115, %p116
      %s119 = sadd.s32 %s118, 1
      %p122 = scmp.eq.s32.totalorder %s21, 1
      %p123 = scmp.ne.s32.totalorder %s118, %s120
      %p124 = scmp.eq.s32.totalorder %s21, 0
      %p125 = por %p123, %p124
      %p126 = scmp.ne.s32.totalorder %s118, %s120
      %p127 = scmp.eq.s32.totalorder %s26, 1
      %p128 = por %p126, %p127
      %p129 = scmp.ne.s32.totalorder %s120, %s121
      %p130 = scmp.eq.s32.totalorder %s26, 0
      %p131 = por %p129, %p130
      %p132 = scmp.ne.s32.totalorder %s120, %s121
      %p133 = scmp.eq.s32.totalorder %s27, 1
      %p134 = por %p132, %p133
      %p136 = scmp.ne.s32.totalorder %s121, %s135
      %p137 = scmp.eq.s32.totalorder %s27, 0
      %p138 = por %p136, %p137
      %s140 = sadd.s32 %s139, 1
      %p143 = scmp.eq.s32.totalorder %s21, 1
      %p144 = scmp.ne.s32.totalorder %s139, %s141
      %p145 = scmp.eq.s32.totalorder %s21, 0
      %p146 = por %p144, %p145
      %p147 = scmp.ne.s32.totalorder %s139, %s141
      %p148 = scmp.eq.s32.totalorder %s26, 1
      %p149 = por %p147, %p148
      %p150 = scmp.ne.s32.totalorder %s141, %s142
      %p151 = scmp.eq.s32.totalorder %s26, 0
      %p152 = por %p150, %p151
      %p153 = scmp.ne.s32.totalorder %s141, %s142
      %p154 = scmp.eq.s32.totalorder %s27, 1
      %p155 = por %p153, %p154
      %p157 = scmp.ne.s32.totalorder %s142, %s156
      %p158 = scmp.eq.s32.totalorder %s27, 0
      %p159 = por %p157, %p158
      %s161 = sadd.s32 %s160, 1
      %p164 = scmp.eq.s32.totalorder %s21, 1
      %p165 = scmp.ne.s32.totalorder %s160, %s162
      %p166 = scmp.eq.s32.totalorder %s21, 0
      %p167 = por %p165, %p166
      %p168 = scmp.ne.s32.totalorder %s160, %s162
      %p169 = scmp.eq.s32.totalorder %s26, 1
      %p170 = por %p168, %p169
      %p171 = scmp.ne.s32.totalorder %s162, %s163
      %p172 = scmp.eq.s32.totalorder %s26, 0
      %p173 = por %p171, %p172
      %p174 = scmp.ne.s32.totalorder %s162, %s163
      %p175 = scmp.eq.s32.totalorder %s27, 1
      %p176 = por %p174, %p175
      %p178 = scmp.ne.s32.totalorder %s163, %s177
      %p179 = scmp.eq.s32.totalorder %s27, 0
      %p180 = por %p178, %p179
      %s182 = sadd.s32 %s181, 1
      %p185 = scmp.eq.s32.totalorder %s21, 1
      %p186 = scmp.ne.s32.totalorder %s181, %s183
      %p187 = scmp.eq.s32.totalorder %s21, 0
      %p188 = por %p186, %p187
      %p189 = scmp.ne.s32.totalorder %s181, %s183
      %p190 = scmp.eq.s32.totalorder %s26, 1
      %p191 = por %p189, %p190
      %p192 = scmp.ne.s32.totalorder %s183, %s184
      %p193 = scmp.eq.s32.totalorder %s26, 0
      %p194 = por %p192, %p193
      %p195 = scmp.ne.s32.totalorder %s183, %s184
      %p196 = scmp.eq.s32.totalorder %s27, 1
      %p197 = por %p195, %p196
      %p199 = scmp.ne.s32.totalorder %s184, %s198
      %p200 = scmp.eq.s32.totalorder %s27, 0
      %p201 = por %p199, %p200
      %s202 = ssub.s32 %s21, %s28
      %p203 = scmp.eq.s32.totalorder %s202, 0
      %s205 = sadd.s32 %s204, 1
      %s206 = scalar_select %p203, %s204, %s205
      %p209 = pneg %p203
      %p210 = scmp.eq.s32.totalorder %s21, 1
      %p211 = por %p209, %p210
      %p212 = scmp.ne.s32.totalorder %s204, %s207
      %p213 = scmp.eq.s32.totalorder %s21, 0
      %p214 = por %p212, %p213
      %p215 = scmp.ne.s32.totalorder %s204, %s207
      %p216 = scmp.eq.s32.totalorder %s26, 1
      %p217 = por %p215, %p216
      %p218 = scmp.ne.s32.totalorder %s207, %s208
      %p219 = scmp.eq.s32.totalorder %s26, 0
      %p220 = por %p218, %p219
      %p221 = scmp.ne.s32.totalorder %s207, %s208
      %p222 = scmp.eq.s32.totalorder %s27, 1
      %p223 = por %p221, %p222
      %p225 = scmp.ne.s32.totalorder %s208, %s224
      %p226 = scmp.eq.s32.totalorder %s27, 0
      %p227 = por %p225, %p226
      %p228 = scmp.le.s32.totalorder 1, %s21
      %p229 = scmp.lt.s32.totalorder %s21, 3
      %p230 = pnand %p228, %p229
      %p231 = pneg %p230
      // Predicated region
      $region9: #{tpu_custom_call.1} parent=5 // pred_check
        _
      $region10: #{tpu_custom_call.1} parent=5 // pred_check_branch
        %233 = sbr.rel (%p230) target = $region12
      $region11: #{tpu_custom_call.1} parent=5 // pred_region
        %s234 = ssub.s32 %s21, 1
        // Predicated region
        $region13: #{tpu_custom_call.1} parent=11 // pred_check
          %p235 = pneg %p68
        $region14: #{tpu_custom_call.1} parent=11 // pred_check_branch
          %237 = sbr.rel (%p235) target = $region16
        $region15: #{tpu_custom_call.1} parent=11 // pred_region
          %s239 = ssub.s32 2304, 2304
          %240 = vsyncadd [#allocation6], %s239
          %s241 = sshll.u32 [#allocation5], 4
          %s242 = int_to_ptr.vmem [resolvable:$true] %s241
          %247 = dma.hbm_to_vmem [thread:$0]  %s1, 2304, %s242, [#allocation6], 256, 256, 16
        $region16: #{tpu_custom_call.1} parent=11 // pred_fallthru
          _
        // Predicated region
        $region17: #{tpu_custom_call.1} parent=11 // pred_check
          %p248 = pneg %p89
        $region18: #{tpu_custom_call.1} parent=11 // pred_check_branch
          %250 = sbr.rel (%p248) target = $region20
        $region19: #{tpu_custom_call.1} parent=11 // pred_region
          _
        $region20: #{tpu_custom_call.1} parent=11 // pred_fallthru
          _
        // Predicated region
        $region21: #{tpu_custom_call.1} parent=11 // pred_check
          %p251 = pneg %p110
        $region22: #{tpu_custom_call.1} parent=11 // pred_check_branch
          %253 = sbr.rel (%p251) target = $region24
        $region23: #{tpu_custom_call.1} parent=11 // pred_region
          %s255 = ssub.s32 64, 64
          %256 = vsyncadd [#allocation6], %s255
          %s258 = sshll.u32 [#allocation7], 4
          %s259 = int_to_ptr.vmem [resolvable:$true] %s258
          %261 = dma.hbm_to_vmem [thread:$0]  %s3, 64, %s259, [#allocation6]
        $region24: #{tpu_custom_call.1} parent=11 // pred_fallthru
          _
        // Predicated region
        $region25: #{tpu_custom_call.1} parent=11 // pred_check
          %p262 = pneg %p131
        $region26: #{tpu_custom_call.1} parent=11 // pred_check_branch
          %264 = sbr.rel (%p262) target = $region28
        $region27: #{tpu_custom_call.1} parent=11 // pred_region
          _
        $region28: #{tpu_custom_call.1} parent=11 // pred_fallthru
          _
        // Predicated region
        $region29: #{tpu_custom_call.1} parent=11 // pred_check
          %p265 = pneg %p152
        $region30: #{tpu_custom_call.1} parent=11 // pred_check_branch
          %267 = sbr.rel (%p265) target = $region32
        $region31: #{tpu_custom_call.1} parent=11 // pred_region
          _
        $region32: #{tpu_custom_call.1} parent=11 // pred_fallthru
          _
        // Predicated region
        $region33: #{tpu_custom_call.1} parent=11 // pred_check
          %p268 = pneg %p173
        $region34: #{tpu_custom_call.1} parent=11 // pred_check_branch
          %270 = sbr.rel (%p268) target = $region36
        $region35: #{tpu_custom_call.1} parent=11 // pred_region
          _
        $region36: #{tpu_custom_call.1} parent=11 // pred_fallthru
          _
        // Predicated region
        $region37: #{tpu_custom_call.1} parent=11 // pred_check
          %p271 = pneg %p194
        $region38: #{tpu_custom_call.1} parent=11 // pred_check_branch
          %273 = sbr.rel (%p271) target = $region40
        $region39: #{tpu_custom_call.1} parent=11 // pred_region
          _
        $region40: #{tpu_custom_call.1} parent=11 // pred_fallthru
          _
      $region12: #{tpu_custom_call.1} parent=5 // pred_fallthru
        _
      %p274 = scmp.lt.s32.totalorder %s21, 2
      // Predicated region
      $region41: #{tpu_custom_call.1} parent=5 // pred_check
        %p275 = pneg %p274
      $region42: #{tpu_custom_call.1} parent=5 // pred_check_branch
        %277 = sbr.rel (%p275) target = $region44
      $region43: #{tpu_custom_call.1} parent=5 // pred_region
        // Predicated region
        $region45: #{tpu_custom_call.1} parent=43 // pred_check
          %p278 = pneg %p41
        $region46: #{tpu_custom_call.1} parent=43 // pred_check_branch
          %280 = sbr.rel (%p278) target = $region48
        $region47: #{tpu_custom_call.1} parent=43 // pred_region
          %s281 = sand.u32 %s31, 1
          %s282 = scalar_lea.sflag [#allocation3], %s281
          %s283 = sand.u32 %s31, 1
          %s284 = smul.addr %s283, 16
          %s285 = scalar_lea.vmem [#allocation2], %s284
          %s287 = ssub.s32 256, 256
          %288 = vsyncadd %s282, %s287
          %s289 = smul.addr %s21, 2
          %s290 = smul.addr %s289, 128
          %s291 = scalar_lea.hbm %s0, %s290
          %s293 = sshll.u32 %s285, 4
          %s294 = int_to_ptr.vmem [resolvable:$true] %s293
          %296 = dma.hbm_to_vmem [thread:$0]  %s291, 256, %s294, %s282
        $region48: #{tpu_custom_call.1} parent=43 // pred_fallthru
          _
      $region44: #{tpu_custom_call.1} parent=5 // pred_fallthru
        _
      %p297 = scmp.le.s32.totalorder 1, %s21
      %p298 = scmp.lt.s32.totalorder %s21, 3
      %p299 = pnand %p297, %p298
      %p300 = pneg %p299
      // Predicated region
      $region49: #{tpu_custom_call.1} parent=5 // pred_check
        _
      $region50: #{tpu_custom_call.1} parent=5 // pred_check_branch
        %302 = sbr.rel (%p299) target = $region52
      $region51: #{tpu_custom_call.1} parent=5 // pred_region
        %s303 = ssub.s32 %s21, 1
        %s304 = sand.u32 %s34, 1
        %s305 = scalar_lea.sflag [#allocation3], %s304
        %s306 = sand.u32 %s34, 1
        %s307 = smul.addr %s306, 16
        %s308 = scalar_lea.vmem [#allocation2], %s307
        // Predicated region
        $region53: #{tpu_custom_call.1} parent=51 // pred_check
          %p309 = pneg %p47
        $region54: #{tpu_custom_call.1} parent=51 // pred_check_branch
          %311 = sbr.rel (%p309) target = $region56
        $region55: #{tpu_custom_call.1} parent=51 // pred_region
          %312 = dma.done %s305, 256
        $region56: #{tpu_custom_call.1} parent=51 // pred_fallthru
          _
        // Predicated region
        $region57: #{tpu_custom_call.1} parent=51 // pred_check
          %p313 = pneg %p68
        $region58: #{tpu_custom_call.1} parent=51 // pred_check_branch
          %315 = sbr.rel (%p313) target = $region60
        $region59: #{tpu_custom_call.1} parent=51 // pred_region
          %316 = dma.done [#allocation6], 2304
        $region60: #{tpu_custom_call.1} parent=51 // pred_fallthru
          _
        // Predicated region
        $region61: #{tpu_custom_call.1} parent=51 // pred_check
          %p317 = pneg %p110
        $region62: #{tpu_custom_call.1} parent=51 // pred_check_branch
          %319 = sbr.rel (%p317) target = $region64
        $region63: #{tpu_custom_call.1} parent=51 // pred_region
          %320 = dma.done [#allocation6], 64
        $region64: #{tpu_custom_call.1} parent=51 // pred_fallthru
          _
        %s321 = sand.u32 %s34, 1
        %s322 = scalar_lea.sflag [#allocation3], %s321
        %s323 = sand.u32 %s34, 1
        %s324 = smul.addr %s323, 16
        %s325 = scalar_lea.vmem [#allocation2], %s324
        %p326 = pneg %p47
        %p327 = pneg %p44
        %p328 = pneg %p68
        %p329 = pneg %p65
        %p330 = pneg %p89
        %p331 = pneg %p86
        %p332 = pneg %p110
        %p333 = pneg %p107
        %p334 = pneg %p131
        %p335 = pneg %p128
        %p336 = pneg %p152
        %p337 = pneg %p149
        %p338 = pneg %p173
        %p339 = pneg %p170
        %p340 = pneg %p194
        %p341 = pneg %p191
        %p342 = pneg %p220
        %p343 = pneg %p217
        %s344 = sand.u32 %s207, 1
        %s345 = scalar_lea.sflag [#allocation4], %s344
        %s346 = sand.u32 %s207, 1
        %s347 = smul.addr %s346, 32
        %s348 = scalar_lea.vmem [#allocation8], %s347
        %v350 = vlaneseq
        %v351 = vshrl.u32 %v350, 7
        %vm352 = vcmp.eq.s32.totalorder %v351, 0
        %v353 = vsel %vm352, 1, 0
        %v354 = vcvt.s32.f32 %v353
        %v355 = vld [vmem:[%s308] sm:$0xff]
        %v356 = vld [vmem:[%s308 + $0x8] sm:$0xff]
        %v357 = vpack.c.bf16 %v354, %v355
        %v358 = vpack.c.bf16 %v354, %v356
        %v359 = vld [vmem:[%s2] sm:$0xf]
        %v360 = vld [vmem:[%s2 + $0x4] sm:$0xf]
        %v361 = vld [vmem:[%s2 + $0x8] sm:$0xf]
        %v365 = vunpack.c.l.b16 %v359
        %v366 = vunpack.c.l.b16 %v360
        %v367 = vunpack.c.l.b16 %v361
        %v368 = vpack.c.b16 %v366, %v365
        %v369 = vpack.c.b16 %v367, %v367
        %vm370 = vcmask 130048
        %v372 = vsel %vm370, %v368, 0
        %v375 = vsel %vm370, %v369, 0
        %377 = vmatprep.subr.bf16.mxu0 %v358
        %378 = vmatpush1.bf16.msra.mxu0 %v357
        %379 = vmatprep.subr.bf16.mxu0 0
        %380 = vmatpush1.bf16.msra.mxu0 0
        %381 = vmatprep.subr.bf16.mxu0 0
        %382 = vmatpush1.bf16.msra.mxu0 0
        %383 = vmatprep.subr.bf16.mxu0 0
        %384 = vmatpush1.bf16.msra.mxu0 0
        %385 = vmatprep.subr.bf16.mxu0 0
        %386 = vmatpush1.bf16.msra.mxu0 0
        %387 = vmatprep.subr.bf16.mxu0 0
        %388 = vmatpush1.bf16.msra.mxu0 0
        %389 = vmatprep.subr.bf16.mxu0 0
        %390 = vmatpush1.bf16.msra.mxu0 0
        %391 = vmatprep.subr.bf16.mxu0 0
        %392 = vmatpush1.bf16.msra.mxu0 0
        %393 = vmatprep.subr.bf16.mxu0 0
        %394 = vmatpush1.bf16.msra.mxu0 0
        %395 = vmatprep.subr.bf16.mxu0 0
        %396 = vmatpush1.bf16.msra.mxu0 0
        %397 = vmatprep.subr.bf16.mxu0 0
        %398 = vmatpush1.bf16.msra.mxu0 0
        %399 = vmatprep.subr.bf16.mxu0 0
        %400 = vmatpush1.bf16.msra.mxu0 0
        %401 = vmatprep.subr.bf16.mxu0 0
        %402 = vmatpush1.bf16.msra.mxu0 0
        %403 = vmatprep.subr.bf16.mxu0 0
        %404 = vmatpush1.bf16.msra.mxu0 0
        %405 = vmatprep.subr.bf16.mxu0 0
        %406 = vmatpush1.bf16.msra.mxu0 0
        %407 = vmatprep.subr.bf16.mxu0 0
        %408 = vmatpush1.bf16.msra.mxu0 0
        %409 = vmatprep.mubr.bf16.mxu0 0
        %410 = vmatmul.mubr.bf16.gmra.mrb[0].mxu0 %v372
        %v411 = vpop.f32.mrb[0].mxu0
        %v412 = vadd.f32 0.0, %v411
        %v413 = vpop.f32.mrb[0].mxu0
        %v414 = vadd.f32 0.0, %v413
        %v415 = vpop.f32.mrb[0].mxu0
        %v416 = vadd.f32 0.0, %v415
        %v417 = vpop.f32.mrb[0].mxu0
        %v418 = vadd.f32 0.0, %v417
        %419 = vmatprep.mubr.bf16.mxu0 0
        %420 = vmatmul.mubr.bf16.gmra.mrb[0].mxu0 %v375
        %v421 = vpop.f32.mrb[0].mxu0
        %v422 = vadd.f32 0.0, %v421
        %v423 = vpop.f32.mrb[0].mxu0
        %v424 = vadd.f32 0.0, %v423
        %v425 = vpop.f32.mrb[0].mxu0
        %v426 = vpop.f32.mrb[0].mxu0
        %427 = vdwg.mxu0
        %v428 = vmax.f32 %v412, 0.0
        %v429 = vmax.f32 %v414, 0.0
        %430 = vrot.lane.b32.xlu0 %v428, 17
        %v431 = vpop.permute.xlu0 %430
        %432 = vrot.lane.b32.xlu0 %v429, 17
        %v433 = vpop.permute.xlu0 %432
        %v434 = vlaneseq
        %v435 = vand.u32 %v434, 127
        %vm436 = vcmp.lt.s32.totalorder %v435, 17
        %v437 = vsel %vm436, %v431, %v433
        %v438 = vsel %vm436, %v433, %v431
        %v439 = vld [vmem:[#allocation5] sm:$0xff]
        %v440 = vld [vmem:[#allocation5 + $0x8] sm:$0xff]
        %v441 = vmul.f32 %v438, %v439
        %v442 = vmul.f32 %v437, %v440
        %443 = vrot.lane.b32.xlu0 %v428, 16
        %v444 = vpop.permute.xlu0 %443
        %445 = vrot.lane.b32.xlu0 %v429, 16
        %v446 = vpop.permute.xlu0 %445
        %vm447 = vcmp.lt.s32.totalorder %v435, 16
        %v448 = vsel %vm447, %v444, %v446
        %v449 = vsel %vm447, %v446, %v444
        %s450 = scalar_lea.vmem [#allocation5], 16
        %v451 = vld [vmem:[%s450] sm:$0xff]
        %v452 = vld [vmem:[%s450 + $0x8] sm:$0xff]
        %v453 = vmul.f32 %v449, %v451
        %v454 = vmul.f32 %v448, %v452
        %455 = vrot.lane.b32.xlu0 %v428, 15
        %v456 = vpop.permute.xlu0 %455
        %457 = vrot.lane.b32.xlu0 %v429, 15
        %v458 = vpop.permute.xlu0 %457
        %vm459 = vcmp.lt.s32.totalorder %v435, 15
        %v460 = vsel %vm459, %v456, %v458
        %v461 = vsel %vm459, %v458, %v456
        %s462 = scalar_lea.vmem [#allocation5], 32
        %v463 = vld [vmem:[%s462] sm:$0xff]
        %v464 = vld [vmem:[%s462 + $0x8] sm:$0xff]
        %v465 = vmul.f32 %v461, %v463
        %v466 = vmul.f32 %v460, %v464
        %467 = vrot.lane.b32.xlu0 %v428, 1
        %v468 = vpop.permute.xlu0 %467
        %469 = vrot.lane.b32.xlu0 %v429, 1
        %v470 = vpop.permute.xlu0 %469
        %vm471 = vcmp.lt.s32.totalorder %v435, 1
        %v472 = vsel %vm471, %v468, %v470
        %v473 = vsel %vm471, %v470, %v468
        %s474 = scalar_lea.vmem [#allocation5], 48
        %v475 = vld [vmem:[%s474] sm:$0xff]
        %v476 = vld [vmem:[%s474 + $0x8] sm:$0xff]
        %v477 = vmul.f32 %v473, %v475
        %v478 = vmul.f32 %v472, %v476
        %479 = vrot.lane.b32.xlu0 %v428, 127
        %v480 = vpop.permute.xlu0 %479
        %481 = vrot.lane.b32.xlu0 %v429, 127
        %v482 = vpop.permute.xlu0 %481
        %vm483 = vcmp.lt.s32.totalorder %v435, 127
        %v484 = vsel %vm483, %v480, %v482
        %v485 = vsel %vm483, %v482, %v480
        %s486 = scalar_lea.vmem [#allocation5], 80
        %v487 = vld [vmem:[%s486] sm:$0xff]
        %v488 = vld [vmem:[%s486 + $0x8] sm:$0xff]
        %v489 = vmul.f32 %v484, %v487
        %v490 = vmul.f32 %v485, %v488
        %491 = vrot.lane.b32.xlu0 %v428, 113
        %v492 = vpop.permute.xlu0 %491
        %493 = vrot.lane.b32.xlu0 %v429, 113
        %v494 = vpop.permute.xlu0 %493
        %vm495 = vcmp.lt.s32.totalorder %v435, 113
        %v496 = vsel %vm495, %v492, %v494
        %v497 = vsel %vm495, %v494, %v492
        %s498 = scalar_lea.vmem [#allocation5], 96
        %v499 = vld [vmem:[%s498] sm:$0xff]
        %v500 = vld [vmem:[%s498 + $0x8] sm:$0xff]
        %v501 = vmul.f32 %v496, %v499
        %v502 = vmul.f32 %v497, %v500
        %503 = vrot.lane.b32.xlu0 %v428, 112
        %v504 = vpop.permute.xlu0 %503
        %505 = vrot.lane.b32.xlu0 %v429, 112
        %v506 = vpop.permute.xlu0 %505
        %vm507 = vcmp.lt.s32.totalorder %v435, 112
        %v508 = vsel %vm507, %v504, %v506
        %v509 = vsel %vm507, %v506, %v504
        %s510 = scalar_lea.vmem [#allocation5], 112
        %v511 = vld [vmem:[%s510] sm:$0xff]
        %v512 = vld [vmem:[%s510 + $0x8] sm:$0xff]
        %v513 = vmul.f32 %v508, %v511
        %v514 = vmul.f32 %v509, %v512
        %515 = vrot.lane.b32.xlu0 %v428, 111
        %v516 = vpop.permute.xlu0 %515
        %517 = vrot.lane.b32.xlu0 %v429, 111
        %v518 = vpop.permute.xlu0 %517
        %vm519 = vcmp.lt.s32.totalorder %v435, 111
        %v520 = vsel %vm519, %v516, %v518
        %v521 = vsel %vm519, %v518, %v516
        %s522 = scalar_lea.vmem [#allocation5], 128
        %v523 = vld [vmem:[%s522] sm:$0xff]
        %v524 = vld [vmem:[%s522 + $0x8] sm:$0xff]
        %v525 = vmul.f32 %v520, %v523
        %v526 = vmul.f32 %v521, %v524
        %v527 = vpack.c.bf16 %v453, %v441
        %v528 = vpack.c.bf16 %v454, %v442
        %v529 = vpack.c.bf16 %v477, %v465
        %v530 = vpack.c.bf16 %v478, %v466
        %v531 = vpack.c.bf16 %v489, %v428
        %v532 = vpack.c.bf16 %v490, %v429
        %v533 = vpack.c.bf16 %v513, %v501
        %v534 = vpack.c.bf16 %v514, %v502
        %v535 = vpack.c.bf16 %v354, %v525
        %v536 = vpack.c.bf16 %v354, %v526
        %v537 = vld [vmem:[#allocation7] sm:$0xf]
        %vm538 = vcmask 654336
        %v540 = vsel %vm538, %v537, 0
        %542 = vmatprep.subr.bf16.mxu0 %v528
        %543 = vmatpush1.bf16.msra.mxu0 %v527
        %544 = vmatprep.subr.bf16.mxu0 %v530
        %545 = vmatpush1.bf16.msra.mxu0 %v529
        %546 = vmatprep.subr.bf16.mxu0 %v532
        %547 = vmatpush1.bf16.msra.mxu0 %v531
        %548 = vmatprep.subr.bf16.mxu0 %v534
        %549 = vmatpush1.bf16.msra.mxu0 %v533
        %550 = vmatprep.subr.bf16.mxu0 %v536
        %551 = vmatpush1.bf16.msra.mxu0 %v535
        %552 = vmatprep.subr.bf16.mxu0 0
        %553 = vmatpush1.bf16.msra.mxu0 0
        %554 = vmatprep.subr.bf16.mxu0 0
        %555 = vmatpush1.bf16.msra.mxu0 0
        %556 = vmatprep.subr.bf16.mxu0 0
        %557 = vmatpush1.bf16.msra.mxu0 0
        %558 = vmatprep.subr.bf16.mxu0 0
        %559 = vmatpush1.bf16.msra.mxu0 0
        %560 = vmatprep.subr.bf16.mxu0 0
        %561 = vmatpush1.bf16.msra.mxu0 0
        %562 = vmatprep.subr.bf16.mxu0 0
        %563 = vmatpush1.bf16.msra.mxu0 0
        %564 = vmatprep.subr.bf16.mxu0 0
        %565 = vmatpush1.bf16.msra.mxu0 0
        %566 = vmatprep.subr.bf16.mxu0 0
        %567 = vmatpush1.bf16.msra.mxu0 0
        %568 = vmatprep.subr.bf16.mxu0 0
        %569 = vmatpush1.bf16.msra.mxu0 0
        %570 = vmatprep.subr.bf16.mxu0 0
        %571 = vmatpush1.bf16.msra.mxu0 0
        %572 = vmatprep.subr.bf16.mxu0 0
        %573 = vmatpush1.bf16.msra.mxu0 0
        %574 = vmatprep.mubr.bf16.mxu0 0
        %575 = vmatmul.mubr.bf16.gmra.mrb[0].mxu0 %v540
        %v576 = vpop.f32.mrb[0].mxu0
        %v577 = vadd.f32 0.0, %v576
        %v578 = vpop.f32.mrb[0].mxu0
        %v579 = vadd.f32 0.0, %v578
        %v580 = vpop.f32.mrb[0].mxu0
        %v581 = vpop.f32.mrb[0].mxu0
        %582 = vdwg.mxu0
        %v583 = vmax.f32 %v577, 0.0
        %v584 = vmax.f32 %v579, 0.0
        %v585 = vpack.c.bf16 %v354, %v583
        %v586 = vpack.c.bf16 %v354, %v584
        %v587 = vld [vmem:[%s4] sm:$0xf]
        %v588 = vld [vmem:[%s4 + $0x4] sm:$0xf]
        %v591 = vunpack.c.l.b16 %v587
        %v592 = vunpack.c.l.b16 %v588
        %v593 = vpack.c.b16 %v592, %v591
        %v595 = vsel %vm370, %v593, 0
        %597 = vmatprep.subr.bf16.mxu0 %v586
        %598 = vmatpush1.bf16.msra.mxu0 %v585
        %599 = vmatprep.subr.bf16.mxu0 0
        %600 = vmatpush1.bf16.msra.mxu0 0
        %601 = vmatprep.subr.bf16.mxu0 0
        %602 = vmatpush1.bf16.msra.mxu0 0
        %603 = vmatprep.subr.bf16.mxu0 0
        %604 = vmatpush1.bf16.msra.mxu0 0
        %605 = vmatprep.subr.bf16.mxu0 0
        %606 = vmatpush1.bf16.msra.mxu0 0
        %607 = vmatprep.subr.bf16.mxu0 0
        %608 = vmatpush1.bf16.msra.mxu0 0
        %609 = vmatprep.subr.bf16.mxu0 0
        %610 = vmatpush1.bf16.msra.mxu0 0
        %611 = vmatprep.subr.bf16.mxu0 0
        %612 = vmatpush1.bf16.msra.mxu0 0
        %613 = vmatprep.subr.bf16.mxu0 0
        %614 = vmatpush1.bf16.msra.mxu0 0
        %615 = vmatprep.subr.bf16.mxu0 0
        %616 = vmatpush1.bf16.msra.mxu0 0
        %617 = vmatprep.subr.bf16.mxu0 0
        %618 = vmatpush1.bf16.msra.mxu0 0
        %619 = vmatprep.subr.bf16.mxu0 0
        %620 = vmatpush1.bf16.msra.mxu0 0
        %621 = vmatprep.subr.bf16.mxu0 0
        %622 = vmatpush1.bf16.msra.mxu0 0
        %623 = vmatprep.subr.bf16.mxu0 0
        %624 = vmatpush1.bf16.msra.mxu0 0
        %625 = vmatprep.subr.bf16.mxu0 0
        %626 = vmatpush1.bf16.msra.mxu0 0
        %627 = vmatprep.subr.bf16.mxu0 0
        %628 = vmatpush1.bf16.msra.mxu0 0
        %629 = vmatprep.mubr.bf16.mxu0 0
        %630 = vmatmul.mubr.bf16.gmra.mrb[0].mxu0 %v595
        %v631 = vpop.f32.mrb[0].mxu0
        %v632 = vadd.f32 %v416, %v631
        %v633 = vpop.f32.mrb[0].mxu0
        %v634 = vadd.f32 %v418, %v633
        %v635 = vpop.f32.mrb[0].mxu0
        %v636 = vadd.f32 %v422, %v635
        %v637 = vpop.f32.mrb[0].mxu0
        %v638 = vadd.f32 %v424, %v637
        %639 = vdwg.mxu0
        %v640 = vmax.f32 %v632, 0.0
        %v641 = vmax.f32 %v634, 0.0
        %v642 = vmax.f32 %v636, 0.0
        %v643 = vmax.f32 %v638, 0.0
        %v644 = vpack.c.bf16 %v642, %v640
        %v645 = vpack.c.bf16 %v643, %v641
        %v646 = vpack.c.bf16 %v354, %v354
        %v647 = vld [vmem:[%s5] sm:$0xf]
        %v648 = vld [vmem:[%s5 + $0x4] sm:$0xf]
        %v649 = vld [vmem:[%s5 + $0x8] sm:$0xf]
        %v653 = vunpack.c.l.b16 %v647
        %v654 = vunpack.c.l.b16 %v648
        %v655 = vunpack.c.l.b16 %v649
        %v656 = vpack.c.b16 %v654, %v653
        %v657 = vpack.c.b16 %v655, %v655
        %vm658 = vcmask 195584
        %v660 = vsel %vm658, %v656, 0
        %v663 = vsel %vm658, %v657, 0
        %vm665 = vcmask 1043456
        %v667 = vsel %vm665, %v646, 0
        %669 = vmatprep.subr.bf16.mxu0 %v645
        %670 = vmatpush1.bf16.msra.mxu0 %v644
        %671 = vmatprep.subr.bf16.mxu0 %v667
        %672 = vmatpush1.bf16.msra.mxu0 %v667
        %673 = vmatprep.subr.bf16.mxu0 0
        %674 = vmatpush1.bf16.msra.mxu0 0
        %675 = vmatprep.subr.bf16.mxu0 0
        %676 = vmatpush1.bf16.msra.mxu0 0
        %677 = vmatprep.subr.bf16.mxu0 0
        %678 = vmatpush1.bf16.msra.mxu0 0
        %679 = vmatprep.subr.bf16.mxu0 0
        %680 = vmatpush1.bf16.msra.mxu0 0
        %681 = vmatprep.subr.bf16.mxu0 0
        %682 = vmatpush1.bf16.msra.mxu0 0
        %683 = vmatprep.subr.bf16.mxu0 0
        %684 = vmatpush1.bf16.msra.mxu0 0
        %685 = vmatprep.subr.bf16.mxu0 0
        %686 = vmatpush1.bf16.msra.mxu0 0
        %687 = vmatprep.subr.bf16.mxu0 0
        %688 = vmatpush1.bf16.msra.mxu0 0
        %689 = vmatprep.subr.bf16.mxu0 0
        %690 = vmatpush1.bf16.msra.mxu0 0
        %691 = vmatprep.subr.bf16.mxu0 0
        %692 = vmatpush1.bf16.msra.mxu0 0
        %693 = vmatprep.subr.bf16.mxu0 0
        %694 = vmatpush1.bf16.msra.mxu0 0
        %695 = vmatprep.subr.bf16.mxu0 0
        %696 = vmatpush1.bf16.msra.mxu0 0
        %697 = vmatprep.subr.bf16.mxu0 0
        %698 = vmatpush1.bf16.msra.mxu0 0
        %699 = vmatprep.subr.bf16.mxu0 0
        %700 = vmatpush1.bf16.msra.mxu0 0
        %701 = vmatprep.mubr.bf16.mxu0 0
        %702 = vmatmul.mubr.bf16.gmra.mrb[0].mxu0 %v660
        %v703 = vpop.f32.mrb[0].mxu0
        %v704 = vadd.f32 0.0, %v703
        %v705 = vpop.f32.mrb[0].mxu0
        %v706 = vadd.f32 0.0, %v705
        %v707 = vpop.f32.mrb[0].mxu0
        %v708 = vadd.f32 0.0, %v707
        %v709 = vpop.f32.mrb[0].mxu0
        %v710 = vadd.f32 0.0, %v709
        %711 = vmatprep.mubr.bf16.mxu0 0
        %712 = vmatmul.mubr.bf16.gmra.mrb[0].mxu0 %v663
        %v713 = vpop.f32.mrb[0].mxu0
        %v714 = vadd.f32 0.0, %v713
        %v715 = vpop.f32.mrb[0].mxu0
        %v716 = vadd.f32 0.0, %v715
        %v717 = vpop.f32.mrb[0].mxu0
        %v718 = vpop.f32.mrb[0].mxu0
        %719 = vdwg.mxu0
        %v720 = vmax.f32 %v704, 0.0
        %v721 = vmax.f32 %v706, 0.0
        %722 = vrot.lane.b32.xlu0 %v720, 17
        %v723 = vpop.permute.xlu0 %722
        %724 = vrot.lane.b32.xlu0 %v721, 17
        %v725 = vpop.permute.xlu0 %724
        %v726 = vsel %vm436, %v723, %v725
        %v727 = vsel %vm436, %v725, %v723
        %v728 = vmul.f32 %v727, %v439
        %v729 = vmul.f32 %v726, %v440
        %730 = vrot.lane.b32.xlu0 %v720, 16
        %v731 = vpop.permute.xlu0 %730
        %732 = vrot.lane.b32.xlu0 %v721, 16
        %v733 = vpop.permute.xlu0 %732
        %v734 = vsel %vm447, %v731, %v733
        %v735 = vsel %vm447, %v733, %v731
        %v736 = vmul.f32 %v735, %v451
        %v737 = vmul.f32 %v734, %v452
        %738 = vrot.lane.b32.xlu0 %v720, 15
        %v739 = vpop.permute.xlu0 %738
        %740 = vrot.lane.b32.xlu0 %v721, 15
        %v741 = vpop.permute.xlu0 %740
        %v742 = vsel %vm459, %v739, %v741
        %v743 = vsel %vm459, %v741, %v739
        %v744 = vmul.f32 %v743, %v463
        %v745 = vmul.f32 %v742, %v464
        %746 = vrot.lane.b32.xlu0 %v720, 1
        %v747 = vpop.permute.xlu0 %746
        %748 = vrot.lane.b32.xlu0 %v721, 1
        %v749 = vpop.permute.xlu0 %748
        %v750 = vsel %vm471, %v747, %v749
        %v751 = vsel %vm471, %v749, %v747
        %v752 = vmul.f32 %v751, %v475
        %v753 = vmul.f32 %v750, %v476
        %754 = vrot.lane.b32.xlu0 %v720, 127
        %v755 = vpop.permute.xlu0 %754
        %756 = vrot.lane.b32.xlu0 %v721, 127
        %v757 = vpop.permute.xlu0 %756
        %v758 = vsel %vm483, %v755, %v757
        %v759 = vsel %vm483, %v757, %v755
        %v760 = vmul.f32 %v758, %v487
        %v761 = vmul.f32 %v759, %v488
        %762 = vrot.lane.b32.xlu0 %v720, 113
        %v763 = vpop.permute.xlu0 %762
        %764 = vrot.lane.b32.xlu0 %v721, 113
        %v765 = vpop.permute.xlu0 %764
        %v766 = vsel %vm495, %v763, %v765
        %v767 = vsel %vm495, %v765, %v763
        %v768 = vmul.f32 %v766, %v499
        %v769 = vmul.f32 %v767, %v500
        %770 = vrot.lane.b32.xlu0 %v720, 112
        %v771 = vpop.permute.xlu0 %770
        %772 = vrot.lane.b32.xlu0 %v721, 112
        %v773 = vpop.permute.xlu0 %772
        %v774 = vsel %vm507, %v771, %v773
        %v775 = vsel %vm507, %v773, %v771
        %v776 = vmul.f32 %v774, %v511
        %v777 = vmul.f32 %v775, %v512
        %778 = vrot.lane.b32.xlu0 %v720, 111
        %v779 = vpop.permute.xlu0 %778
        %780 = vrot.lane.b32.xlu0 %v721, 111
        %v781 = vpop.permute.xlu0 %780
        %v782 = vsel %vm519, %v779, %v781
        %v783 = vsel %vm519, %v781, %v779
        %v784 = vmul.f32 %v782, %v523
        %v785 = vmul.f32 %v783, %v524
        %v786 = vpack.c.bf16 %v736, %v728
        %v787 = vpack.c.bf16 %v737, %v729
        %v788 = vpack.c.bf16 %v752, %v744
        %v789 = vpack.c.bf16 %v753, %v745
        %v790 = vpack.c.bf16 %v760, %v720
        %v791 = vpack.c.bf16 %v761, %v721
        %v792 = vpack.c.bf16 %v776, %v768
        %v793 = vpack.c.bf16 %v777, %v769
        %v794 = vpack.c.bf16 %v354, %v784
        %v795 = vpack.c.bf16 %v354, %v785
        %v796 = vld [vmem:[%s6] sm:$0xf]
        %v798 = vsel %vm538, %v796, 0
        %800 = vmatprep.subr.bf16.mxu0 %v787
        %801 = vmatpush1.bf16.msra.mxu0 %v786
        %802 = vmatprep.subr.bf16.mxu0 %v789
        %803 = vmatpush1.bf16.msra.mxu0 %v788
        %804 = vmatprep.subr.bf16.mxu0 %v791
        %805 = vmatpush1.bf16.msra.mxu0 %v790
        %806 = vmatprep.subr.bf16.mxu0 %v793
        %807 = vmatpush1.bf16.msra.mxu0 %v792
        %808 = vmatprep.subr.bf16.mxu0 %v795
        %809 = vmatpush1.bf16.msra.mxu0 %v794
        %810 = vmatprep.subr.bf16.mxu0 0
        %811 = vmatpush1.bf16.msra.mxu0 0
        %812 = vmatprep.subr.bf16.mxu0 0
        %813 = vmatpush1.bf16.msra.mxu0 0
        %814 = vmatprep.subr.bf16.mxu0 0
        %815 = vmatpush1.bf16.msra.mxu0 0
        %816 = vmatprep.subr.bf16.mxu0 0
        %817 = vmatpush1.bf16.msra.mxu0 0
        %818 = vmatprep.subr.bf16.mxu0 0
        %819 = vmatpush1.bf16.msra.mxu0 0
        %820 = vmatprep.subr.bf16.mxu0 0
        %821 = vmatpush1.bf16.msra.mxu0 0
        %822 = vmatprep.subr.bf16.mxu0 0
        %823 = vmatpush1.bf16.msra.mxu0 0
        %824 = vmatprep.subr.bf16.mxu0 0
        %825 = vmatpush1.bf16.msra.mxu0 0
        %826 = vmatprep.subr.bf16.mxu0 0
        %827 = vmatpush1.bf16.msra.mxu0 0
        %828 = vmatprep.subr.bf16.mxu0 0
        %829 = vmatpush1.bf16.msra.mxu0 0
        %830 = vmatprep.subr.bf16.mxu0 0
        %831 = vmatpush1.bf16.msra.mxu0 0
        %832 = vmatprep.mubr.bf16.mxu0 0
        %833 = vmatmul.mubr.bf16.gmra.mrb[0].mxu0 %v798
        %v834 = vpop.f32.mrb[0].mxu0
        %v835 = vadd.f32 0.0, %v834
        %v836 = vpop.f32.mrb[0].mxu0
        %v837 = vadd.f32 0.0, %v836
        %v838 = vpop.f32.mrb[0].mxu0
        %v839 = vpop.f32.mrb[0].mxu0
        %840 = vdwg.mxu0
        %v841 = vmax.f32 %v835, 0.0
        %v842 = vmax.f32 %v837, 0.0
        %v843 = vpack.c.bf16 %v354, %v841
        %v844 = vpack.c.bf16 %v354, %v842
        %v845 = vld [vmem:[%s7] sm:$0xf]
        %v846 = vld [vmem:[%s7 + $0x4] sm:$0xf]
        %v849 = vunpack.c.l.b16 %v845
        %v850 = vunpack.c.l.b16 %v846
        %v851 = vpack.c.b16 %v850, %v849
        %v853 = vsel %vm370, %v851, 0
        %855 = vmatprep.subr.bf16.mxu0 %v844
        %856 = vmatpush1.bf16.msra.mxu0 %v843
        %857 = vmatprep.subr.bf16.mxu0 0
        %858 = vmatpush1.bf16.msra.mxu0 0
        %859 = vmatprep.subr.bf16.mxu0 0
        %860 = vmatpush1.bf16.msra.mxu0 0
        %861 = vmatprep.subr.bf16.mxu0 0
        %862 = vmatpush1.bf16.msra.mxu0 0
        %863 = vmatprep.subr.bf16.mxu0 0
        %864 = vmatpush1.bf16.msra.mxu0 0
        %865 = vmatprep.subr.bf16.mxu0 0
        %866 = vmatpush1.bf16.msra.mxu0 0
        %867 = vmatprep.subr.bf16.mxu0 0
        %868 = vmatpush1.bf16.msra.mxu0 0
        %869 = vmatprep.subr.bf16.mxu0 0
        %870 = vmatpush1.bf16.msra.mxu0 0
        %871 = vmatprep.subr.bf16.mxu0 0
        %872 = vmatpush1.bf16.msra.mxu0 0
        %873 = vmatprep.subr.bf16.mxu0 0
        %874 = vmatpush1.bf16.msra.mxu0 0
        %875 = vmatprep.subr.bf16.mxu0 0
        %876 = vmatpush1.bf16.msra.mxu0 0
        %877 = vmatprep.subr.bf16.mxu0 0
        %878 = vmatpush1.bf16.msra.mxu0 0
        %879 = vmatprep.subr.bf16.mxu0 0
        %880 = vmatpush1.bf16.msra.mxu0 0
        %881 = vmatprep.subr.bf16.mxu0 0
        %882 = vmatpush1.bf16.msra.mxu0 0
        %883 = vmatprep.subr.bf16.mxu0 0
        %884 = vmatpush1.bf16.msra.mxu0 0
        %885 = vmatprep.subr.bf16.mxu0 0
        %886 = vmatpush1.bf16.msra.mxu0 0
        %887 = vmatprep.mubr.bf16.mxu0 0
        %888 = vmatmul.mubr.bf16.gmra.mrb[0].mxu0 %v853
        %v889 = vpop.f32.mrb[0].mxu0
        %v890 = vadd.f32 %v708, %v889
        %v891 = vpop.f32.mrb[0].mxu0
        %v892 = vadd.f32 %v710, %v891
        %v893 = vpop.f32.mrb[0].mxu0
        %v894 = vadd.f32 %v714, %v893
        %v895 = vpop.f32.mrb[0].mxu0
        %v896 = vadd.f32 %v716, %v895
        %897 = vdwg.mxu0
        %v898 = vmax.f32 %v890, 0.0
        %v899 = vmax.f32 %v892, 0.0
        %v900 = vmax.f32 %v894, 0.0
        %v901 = vmax.f32 %v896, 0.0
        %902 = vst [vmem:[%s348] sm:$0xff] %v898
        %903 = vst [vmem:[%s348 + $0x8] sm:$0xff] %v899
        %904 = vst [vmem:[%s348 + $0x10] sm:$0xff] %v900
        %905 = vst [vmem:[%s348 + $0x18] sm:$0xff] %v901
        %s906 = sand.u32 %s207, 1
        %s907 = scalar_lea.sflag [#allocation4], %s906
        %s908 = sand.u32 %s207, 1
        %s909 = smul.addr %s908, 32
        %s910 = scalar_lea.vmem [#allocation8], %s909
        // Predicated region
        $region65: #{tpu_custom_call.1} parent=51 // pred_check
          %p911 = pneg %p217
        $region66: #{tpu_custom_call.1} parent=51 // pred_check_branch
          %913 = sbr.rel (%p911) target = $region68
        $region67: #{tpu_custom_call.1} parent=51 // pred_region
          %s915 = ssub.s32 512, 512
          %916 = vsyncadd %s907, %s915
          %s917 = smul.addr %s26, 4
          %s918 = smul.addr %s917, 128
          %s919 = scalar_lea.hbm %s8, %s918
          %s920 = sshll.u32 %s910, 4
          %s921 = int_to_ptr.vmem [resolvable:$true] %s920
          %926 = dma.vmem_to_hbm [thread:$0]  %s921, 512, %s919, %s907, 256, 256, 16
        $region68: #{tpu_custom_call.1} parent=51 // pred_fallthru
          _
      $region52: #{tpu_custom_call.1} parent=5 // pred_fallthru
        _
      %p927 = scmp.le.s32.totalorder 2, %s21
      // Predicated region
      $region69: #{tpu_custom_call.1} parent=5 // pred_check
        %p928 = pneg %p927
      $region70: #{tpu_custom_call.1} parent=5 // pred_check_branch
        %930 = sbr.rel (%p928) target = $region72
      $region71: #{tpu_custom_call.1} parent=5 // pred_region
        %s931 = ssub.s32 %s21, 2
        // Predicated region
        $region73: #{tpu_custom_call.1} parent=71 // pred_check
          %p932 = pneg %p223
        $region74: #{tpu_custom_call.1} parent=71 // pred_check_branch
          %934 = sbr.rel (%p932) target = $region76
        $region75: #{tpu_custom_call.1} parent=71 // pred_region
          %s935 = sand.u32 %s208, 1
          %s936 = scalar_lea.sflag [#allocation4], %s935
          %s937 = sand.u32 %s208, 1
          %s938 = smul.addr %s937, 32
          %s939 = scalar_lea.vmem [#allocation8], %s938
          %940 = dma.done %s936, 512
        $region76: #{tpu_custom_call.1} parent=71 // pred_fallthru
          _
      $region72: #{tpu_custom_call.1} parent=5 // pred_fallthru
        _
    $region6: #{tpu_custom_call.1} parent=1 // loop_footer
      %s25 = sadd.s32 1, %s21
    $region7: #{tpu_custom_call.1} parent=1 // loop_footer_branch
      %20 = sbr.rel target = $region3
    $region8: #{tpu_custom_call.1} parent=1 // loop_exit
      _
    %941 = vsyncpa [#allocation3], 1
    %s942 = scalar_lea.sflag [#allocation3], 1
    %943 = vsyncpa %s942, 1
    %944 = vsyncpa [#allocation6], 1
    %945 = vsyncpa [#allocation4], 1
    %s946 = scalar_lea.sflag [#allocation4], 1
    %947 = vsyncpa %s946, 1

</llo_original>
